<compile_context>
chip_gen: v6e
topology: v6e:2x2x1
jax: 0.10.0
libtpu: 0.0.40
codegen_flags: <defaults>
</compile_context>

<pallas_src>
import jax
import jax.numpy as jnp
from jax.experimental import pallas as pl
from jax.experimental.pallas import tpu as pltpu


# ----------------------------------------------------------------------------
# Pallas kernel: one (batch, spatial-tile) step of the gated fusion block
# ----------------------------------------------------------------------------
def gated_fusion_kernel(x_ref, y_ref, w_ref, b_ref, out_ref):
    """Refs (per grid step):
         x_ref, y_ref, out_ref : (1, C, TS)  channels on sublane, spatial on lane
         w_ref                 : (4, C, C)   [Wg_x, Wg_y, Wc_fg, Wc_pg]
         b_ref                 : (2, C, 1)   [b_gate, b_conv]
    """
    x = x_ref[0]                                  # (C, TS)
    y = y_ref[0]                                  # (C, TS)

    # gate = sigmoid(Wg @ cat([x, y]) + bg), with the concat folded into two taps
    g_lin = (jnp.dot(w_ref[0], x, preferred_element_type=jnp.float32)
             + jnp.dot(w_ref[1], y, preferred_element_type=jnp.float32)
             + b_ref[0])
    gate = 1.0 / (1.0 + jnp.exp(-g_lin))          # exact sigmoid (EUP exp + div)

    pg = x * gate                                 # x * G
    fg = y * (1.0 - gate)                         # y * (1 - G)

    # out = Wc @ cat([FG, PG]) + bc, concat again folded into two matmul taps
    out = (jnp.dot(w_ref[2], fg, preferred_element_type=jnp.float32)
           + jnp.dot(w_ref[3], pg, preferred_element_type=jnp.float32)
           + b_ref[1])
    out_ref[0] = out.astype(out_ref.dtype)


# ----------------------------------------------------------------------------
# Wrapper (NCHW in / NCHW out, like the PyTorch module)
# ----------------------------------------------------------------------------
def _pick_spatial_tile(hw):
    # Largest lane-dense tile that divides H*W; fall back to full extent.
    for ts in (2048, 1024, 512, 256, 128):
        if hw % ts == 0:
            return ts
    return hw


def gated_fusion_pallas(x, y, params):
    N, C, H, W = x.shape
    HW = H * W
    TS = _pick_spatial_tile(HW)

    # NCHW -> (N, C, H*W) is a free collapsing reshape (no transpose / copy).
    xr = x.reshape(N, C, HW).astype(jnp.float32)
    yr = y.reshape(N, C, HW).astype(jnp.float32)

    Wg = params['Wg'].astype(jnp.float32)          # (C, 2C)   gate 1x1 conv
    bg = params['bg'].astype(jnp.float32)          # (C,)
    Wc = params['Wc'].astype(jnp.float32)          # (C, 2C)   output 1x1 conv
    bc = params['bc'].astype(jnp.float32)          # (C,)

    # Split the concat dimension of each 1x1 conv into its two input branches
    # and consolidate everything into two small resident parameter arrays.
    w_all = jnp.stack([Wg[:, :C], Wg[:, C:], Wc[:, :C], Wc[:, C:]], axis=0)  # (4,C,C)
    b_all = jnp.stack([bg, bc], axis=0).reshape(2, C, 1)                      # (2,C,1)

    grid = (N, HW // TS)
    data_spec = pl.BlockSpec((1, C, TS), lambda n, s: (n, 0, s))

    out_r = pl.pallas_call(
        gated_fusion_kernel,
        out_shape=jax.ShapeDtypeStruct((N, C, HW), jnp.float32),
        grid=grid,
        in_specs=[data_spec,                                        # x tile
                  data_spec,                                        # y tile
                  pl.BlockSpec((4, C, C), lambda n, s: (0, 0, 0)),  # weights (resident)
                  pl.BlockSpec((2, C, 1), lambda n, s: (0, 0, 0))], # biases  (resident)
        out_specs=data_spec,
        compiler_params=pltpu.CompilerParams(
            dimension_semantics=("parallel", "parallel"),
            vmem_limit_bytes=32 * 1024 * 1024),
    )(xr, yr, w_all, b_all)

    return out_r.reshape(N, C, H, W)


# ----------------------------------------------------------------------------
# Deterministic synthetic parameters (conv weights as (C_out, 2C) matrices)
# ----------------------------------------------------------------------------
def init_params(key, c):
    k1, k2, k3, k4 = jax.random.split(key, 4)
    n = lambda k, s, sc=0.2: jax.random.normal(k, s, jnp.float32) * sc
    return dict(Wg=n(k1, (c, 2 * c)), bg=n(k2, (c,)),
                Wc=n(k3, (c, 2 * c)), bc=n(k4, (c,)))


# ----------------------------------------------------------------------------
# Pure-JAX reference (mirrors the PyTorch forward) for a correctness check
# ----------------------------------------------------------------------------
def gated_fusion_reference(x, y, p):
    cat1 = jnp.concatenate([x, y], axis=1)
    g = jax.nn.sigmoid(jnp.einsum('oi,nihw->nohw', p['Wg'], cat1)
                       + p['bg'][None, :, None, None])
    pg = x * g
    fg = y * (1.0 - g)
    cat2 = jnp.concatenate([fg, pg], axis=1)
    return (jnp.einsum('oi,nihw->nohw', p['Wc'], cat2)
            + p['bc'][None, :, None, None])


if __name__ == "__main__":
    key = jax.random.PRNGKey(0)
    N, C, H, W = 2, 8, 16, 16            # x,y: (N, C, H, W), H*W = 256 (lane-dense)
    kx, ky, kp = jax.random.split(key, 3)

    x = jax.random.normal(kx, (N, C, H, W), jnp.float32)
    y = jax.random.normal(ky, (N, C, H, W), jnp.float32)
    params = init_params(kp, C)

    out = gated_fusion_pallas(x, y, params)
    out = jax.block_until_ready(out)

    ref = gated_fusion_reference(x, y, params)
    assert out.shape == (N, C, H, W), out.shape
    assert jnp.allclose(out, ref, atol=1e-4, rtol=1e-4), "mismatch vs JAX reference"

    print("KERNEL_OK")
</pallas_src>

<mosaic_0001>
module attributes {stable_mosaic.version = 11 : i64} {
  func.func @gated_fusion_kernel(%arg0: i32, %arg1: i32, %arg2: memref<1x8x256xf32, #tpu.memory_space<vmem>>, %arg3: memref<1x8x256xf32, #tpu.memory_space<vmem>>, %arg4: memref<4x8x8xf32, #tpu.memory_space<vmem>>, %arg5: memref<2x8x1xf32, #tpu.memory_space<vmem>>, %arg6: memref<1x8x256xf32, #tpu.memory_space<vmem>>) attributes {dimension_semantics = [#tpu.dimension_semantics<parallel>, #tpu.dimension_semantics<parallel>], iteration_bounds = array<i64: 2, 1>, scalar_prefetch = 0 : i64, scratch_operands = 0 : i64, tpu.core_type = #tpu.core_type<tc>, window_params = [{transform_indices = @transform_0, window_bounds = array<i64: 1, 8, 256>}, {transform_indices = @transform_1, window_bounds = array<i64: 1, 8, 256>}, {pipeline_mode = #tpu.pipeline_mode<synchronous>, transform_indices = @transform_2, window_bounds = array<i64: 4, 8, 8>}, {pipeline_mode = #tpu.pipeline_mode<synchronous>, transform_indices = @transform_3, window_bounds = array<i64: 2, 8, 1>}, {transform_indices = @transform_4, window_bounds = array<i64: 1, 8, 256>}]} {
    %c0 = arith.constant 0 : index
    %c0_0 = arith.constant 0 : index
    %c0_1 = arith.constant 0 : index
    %0 = vector.load %arg2[%c0, %c0_0, %c0_1] : memref<1x8x256xf32, #tpu.memory_space<vmem>>, vector<1x8x256xf32>
    %1 = vector.shape_cast %0 : vector<1x8x256xf32> to vector<8x256xf32>
    %c0_2 = arith.constant 0 : index
    %c0_3 = arith.constant 0 : index
    %c0_4 = arith.constant 0 : index
    %2 = vector.load %arg3[%c0_2, %c0_3, %c0_4] : memref<1x8x256xf32, #tpu.memory_space<vmem>>, vector<1x8x256xf32>
    %3 = vector.shape_cast %2 : vector<1x8x256xf32> to vector<8x256xf32>
    %c0_5 = arith.constant 0 : index
    %c0_6 = arith.constant 0 : index
    %c0_7 = arith.constant 0 : index
    %4 = vector.load %arg4[%c0_5, %c0_6, %c0_7] : memref<4x8x8xf32, #tpu.memory_space<vmem>>, vector<1x8x8xf32>
    %5 = vector.shape_cast %4 : vector<1x8x8xf32> to vector<8x8xf32>
    %cst = arith.constant dense<0.000000e+00> : vector<8x256xf32>
    %6 = tpu.matmul %5, %1, %cst {dimension_numbers = #tpu.dot_dimension_numbers<[1], [0], [0], [1], [0, 0, 1, 1], [], []>} : vector<8x8xf32>, vector<8x256xf32>, vector<8x256xf32> -> vector<8x256xf32>
    %c1 = arith.constant 1 : index
    %c0_8 = arith.constant 0 : index
    %c0_9 = arith.constant 0 : index
    %7 = vector.load %arg4[%c1, %c0_8, %c0_9] : memref<4x8x8xf32, #tpu.memory_space<vmem>>, vector<1x8x8xf32>
    %8 = vector.shape_cast %7 : vector<1x8x8xf32> to vector<8x8xf32>
    %cst_10 = arith.constant dense<0.000000e+00> : vector<8x256xf32>
    %9 = tpu.matmul %8, %3, %cst_10 {dimension_numbers = #tpu.dot_dimension_numbers<[1], [0], [0], [1], [0, 0, 1, 1], [], []>} : vector<8x8xf32>, vector<8x256xf32>, vector<8x256xf32> -> vector<8x256xf32>
    %10 = arith.addf %6, %9 : vector<8x256xf32>
    %c0_11 = arith.constant 0 : index
    %c0_12 = arith.constant 0 : index
    %c0_13 = arith.constant 0 : index
    %11 = vector.load %arg5[%c0_11, %c0_12, %c0_13] : memref<2x8x1xf32, #tpu.memory_space<vmem>>, vector<1x8x1xf32>
    %12 = vector.shape_cast %11 : vector<1x8x1xf32> to vector<8x1xf32>
    %13 = vector.broadcast %12 : vector<8x1xf32> to vector<8x256xf32>
    %14 = arith.addf %10, %13 : vector<8x256xf32>
    %cst_14 = arith.constant 0.000000e+00 : f32
    %15 = vector.broadcast %cst_14 : f32 to vector<8x256xf32>
    %16 = arith.subf %15, %14 : vector<8x256xf32>
    %17 = math.exp %16 : vector<8x256xf32>
    %cst_15 = arith.constant 1.000000e+00 : f32
    %18 = vector.broadcast %cst_15 : f32 to vector<8x256xf32>
    %19 = arith.addf %18, %17 : vector<8x256xf32>
    %cst_16 = arith.constant 1.000000e+00 : f32
    %20 = vector.broadcast %cst_16 : f32 to vector<8x256xf32>
    %21 = arith.divf %20, %19 : vector<8x256xf32>
    %22 = arith.mulf %1, %21 : vector<8x256xf32>
    %cst_17 = arith.constant 1.000000e+00 : f32
    %23 = vector.broadcast %cst_17 : f32 to vector<8x256xf32>
    %24 = arith.subf %23, %21 : vector<8x256xf32>
    %25 = arith.mulf %3, %24 : vector<8x256xf32>
    %c2 = arith.constant 2 : index
    %c0_18 = arith.constant 0 : index
    %c0_19 = arith.constant 0 : index
    %26 = vector.load %arg4[%c2, %c0_18, %c0_19] : memref<4x8x8xf32, #tpu.memory_space<vmem>>, vector<1x8x8xf32>
    %27 = vector.shape_cast %26 : vector<1x8x8xf32> to vector<8x8xf32>
    %cst_20 = arith.constant dense<0.000000e+00> : vector<8x256xf32>
    %28 = tpu.matmul %27, %25, %cst_20 {dimension_numbers = #tpu.dot_dimension_numbers<[1], [0], [0], [1], [0, 0, 1, 1], [], []>} : vector<8x8xf32>, vector<8x256xf32>, vector<8x256xf32> -> vector<8x256xf32>
    %c3 = arith.constant 3 : index
    %c0_21 = arith.constant 0 : index
    %c0_22 = arith.constant 0 : index
    %29 = vector.load %arg4[%c3, %c0_21, %c0_22] : memref<4x8x8xf32, #tpu.memory_space<vmem>>, vector<1x8x8xf32>
    %30 = vector.shape_cast %29 : vector<1x8x8xf32> to vector<8x8xf32>
    %cst_23 = arith.constant dense<0.000000e+00> : vector<8x256xf32>
    %31 = tpu.matmul %30, %22, %cst_23 {dimension_numbers = #tpu.dot_dimension_numbers<[1], [0], [0], [1], [0, 0, 1, 1], [], []>} : vector<8x8xf32>, vector<8x256xf32>, vector<8x256xf32> -> vector<8x256xf32>
    %32 = arith.addf %28, %31 : vector<8x256xf32>
    %c1_24 = arith.constant 1 : index
    %c0_25 = arith.constant 0 : index
    %c0_26 = arith.constant 0 : index
    %33 = vector.load %arg5[%c1_24, %c0_25, %c0_26] : memref<2x8x1xf32, #tpu.memory_space<vmem>>, vector<1x8x1xf32>
    %34 = vector.shape_cast %33 : vector<1x8x1xf32> to vector<8x1xf32>
    %35 = vector.broadcast %34 : vector<8x1xf32> to vector<8x256xf32>
    %36 = arith.addf %32, %35 : vector<8x256xf32>
    %c0_27 = arith.constant 0 : index
    %c0_28 = arith.constant 0 : index
    %c0_29 = arith.constant 0 : index
    %37 = vector.load %arg6[%c0_27, %c0_28, %c0_29] : memref<1x8x256xf32, #tpu.memory_space<vmem>>, vector<1x8x256xf32>
    %38 = vector.shape_cast %37 : vector<1x8x256xf32> to vector<8x256xf32>
    %39 = vector.shape_cast %36 : vector<8x256xf32> to vector<1x8x256xf32>
    tpu.vector_store %arg6[%c0_27, %c0_28, %c0_29], %39 {strides = array<i32>} : memref<1x8x256xf32, #tpu.memory_space<vmem>>, vector<1x8x256xf32>,
    return
  }
  func.func @transform_0(%arg0: i32, %arg1: i32) -> (i32, i32, i32) {
    %c0_i32 = arith.constant 0 : i32
    %c0_i32_0 = arith.constant 0 : i32
    return %arg0, %c0_i32, %arg1 : i32, i32, i32
  }
  func.func @transform_1(%arg0: i32, %arg1: i32) -> (i32, i32, i32) {
    %c0_i32 = arith.constant 0 : i32
    %c0_i32_0 = arith.constant 0 : i32
    return %arg0, %c0_i32, %arg1 : i32, i32, i32
  }
  func.func @transform_2(%arg0: i32, %arg1: i32) -> (i32, i32, i32) {
    %c0_i32 = arith.constant 0 : i32
    %c0_i32_0 = arith.constant 0 : i32
    %c0_i32_1 = arith.constant 0 : i32
    %c0_i32_2 = arith.constant 0 : i32
    return %c0_i32, %c0_i32_0, %c0_i32_1 : i32, i32, i32
  }
  func.func @transform_3(%arg0: i32, %arg1: i32) -> (i32, i32, i32) {
    %c0_i32 = arith.constant 0 : i32
    %c0_i32_0 = arith.constant 0 : i32
    %c0_i32_1 = arith.constant 0 : i32
    %c0_i32_2 = arith.constant 0 : i32
    return %c0_i32, %c0_i32_0, %c0_i32_1 : i32, i32, i32
  }
  func.func @transform_4(%arg0: i32, %arg1: i32) -> (i32, i32, i32) {
    %c0_i32 = arith.constant 0 : i32
    %c0_i32_0 = arith.constant 0 : i32
    return %arg0, %c0_i32, %arg1 : i32, i32, i32
  }
}

</mosaic_0001>

<llo_original>
// kernel: tpu_custom_call.1
$region0: #{tpu_custom_call.1}
  #allocation0 [shape = 'u32[]', space=smem, size = 0x4, offset = 0x4, fixed_abs, tag = 'smem constant byte address 0x4 - core index']
  #allocation1 [shape = 'u32[144,128]{1,0:T(1,128)}', space=vmem, size = 0x12000, scoped, tag = 'internal scratch']
  %s0 = inlined_call_operand.hbm [shape: f32[2,8,256], index: 0, kind: input, shape index: {}]
  %s1 = inlined_call_operand.hbm [shape: f32[2,8,256], index: 1, kind: input, shape index: {}]
  %s2 = inlined_call_operand.hbm [shape: f32[4,8,8], index: 2, kind: input, shape index: {}]
  %s3 = inlined_call_operand.vmem [shape: f32[2,8,1], index: 3, kind: input, shape index: {}]
  %s4 = inlined_call_operand.hbm [shape: f32[2,8,256], index: 4, kind: output, shape index: {}]
  %s5 = sld [smem:[#allocation0]]
  $region61: #{tpu_custom_call.1} parent=0
    _
  %s7 = ssub.s32 1, %s5
  %s8 = scalar_select 0, %s7, %s5
  $region1: #{tpu_custom_call.1} parent=0
    #allocation2 [shape = 'u8[16384]{0}', space=vmem, size = 0x4000, scoped, tag = 'input window, operand 0']
    #allocation3 [shape = 's32[2]{0}', space=sflag, size = 0x8, scoped, tag = 'scoped memory for tpu_custom_call.1']
    #allocation4 [shape = 's32[2]{0}', space=sflag, size = 0x8, scoped, tag = 'scoped memory for tpu_custom_call.1']
    #allocation5 [shape = 'u8[16384]{0}', space=vmem, size = 0x4000, scoped, tag = 'input window, operand 1']
    #allocation6 [shape = 's32[2]{0}', space=sflag, size = 0x8, scoped, tag = 'scoped memory for tpu_custom_call.1']
    #allocation7 [shape = 'u8[16384]{0}', space=vmem, size = 0x4000, scoped, tag = 'input window, operand 2, single buffered']
    #allocation8 [shape = 'u8[16384]{0}', space=vmem, size = 0x4000, scoped, tag = 'output window, operand 0']
    %9 = vsyncpa [#allocation3], 0
    %s10 = scalar_lea.sflag [#allocation3], 1
    %11 = vsyncpa %s10, 0
    %12 = vsyncpa [#allocation6], 0
    %s13 = scalar_lea.sflag [#allocation6], 1
    %14 = vsyncpa %s13, 0
    %15 = vsyncpa [#allocation4], 0
    %s16 = scalar_lea.sflag [#allocation4], 1
    %17 = vsyncpa %s16, 0
    loop: start=0, step=1, limit=4
    $region2: #{tpu_custom_call.1} parent=1 // loop_pre_header
      _
    $region3: #{tpu_custom_call.1} parent=1 // loop_header
      %s19 = sphi 0, %s23
      %p20 = scmp.ge.s32.totalorder %s19, 4
      %s26 = sphi 0, %s38
      %s27 = sphi 0, %s34
      %s28 = sphi 0, %s26
      %s29 = sphi 0, %s27
      %s30 = sphi 0, %s28
      %s31 = sphi 0, %s29
      %s43 = sphi 0, %s45
      %s46 = sphi 0, %s43
      %s47 = sphi 0, %s46
      %s63 = sphi 0, %s47
      %s71 = sphi 0, %s73
      %s74 = sphi 0, %s71
      %s75 = sphi 0, %s74
      %s91 = sphi 0, %s75
      %s95 = sphi 0, %s95
      %s97 = sphi 0, %s95
      %s98 = sphi 0, %s97
      %s112 = sphi 0, %s98
      %s116 = sphi 0, %s116
      %s118 = sphi 0, %s116
      %s119 = sphi 0, %s118
      %s133 = sphi 0, %s119
      %s141 = sphi 0, %s143
      %s144 = sphi 0, %s141
      %s145 = sphi 0, %s144
      %s161 = sphi 0, %s145
    $region4: #{tpu_custom_call.1} parent=1 // loop_header_branch
      %22 = sbr.rel (%p20) target = $region8
    $region5: #{tpu_custom_call.1} parent=1 // loop_body
      %s24 = ssub.s32 %s19, 1
      %s25 = ssub.s32 %s19, 2
      %s32 = sadd.s32 1, %s27
      %p33 = scmp.ge.s32.totalorder %s32, 1
      %s34 = scalar_select %p33, 0, %s32
      %s35 = sadd.s32 1, %s26
      %s36 = scalar_select %p33, %s35, %s26
      %p37 = scmp.ge.s32.totalorder %s36, 2
      %s38 = scalar_select %p37, 0, %s36
      %s39 = ssub.s32 %s26, %s38
      %s40 = ssub.s32 %s27, %s34
      %s41 = sor.u32 %s39, %s40
      %p42 = scmp.eq.s32.totalorder %s41, 0
      %s44 = sadd.s32 %s43, 1
      %s45 = scalar_select %p42, %s43, %s44
      %p48 = pneg %p42
      %p49 = scmp.eq.s32.totalorder %s19, 1
      %p50 = por %p48, %p49
      %p51 = scmp.ne.s32.totalorder %s43, %s46
      %p52 = scmp.eq.s32.totalorder %s19, 0
      %p53 = por %p51, %p52
      %p54 = scmp.ne.s32.totalorder %s43, %s46
      %p55 = scmp.eq.s32.totalorder %s24, 1
      %p56 = por %p54, %p55
      %p57 = scmp.ne.s32.totalorder %s46, %s47
      %p58 = scmp.eq.s32.totalorder %s24, 0
      %p59 = por %p57, %p58
      %p60 = scmp.ne.s32.totalorder %s46, %s47
      %p61 = scmp.eq.s32.totalorder %s25, 1
      %p62 = por %p60, %p61
      %p64 = scmp.ne.s32.totalorder %s47, %s63
      %p65 = scmp.eq.s32.totalorder %s25, 0
      %p66 = por %p64, %p65
      %s67 = ssub.s32 %s26, %s38
      %s68 = ssub.s32 %s27, %s34
      %s69 = sor.u32 %s67, %s68
      %p70 = scmp.eq.s32.totalorder %s69, 0
      %s72 = sadd.s32 %s71, 1
      %s73 = scalar_select %p70, %s71, %s72
      %p76 = pneg %p70
      %p77 = scmp.eq.s32.totalorder %s19, 1
      %p78 = por %p76, %p77
      %p79 = scmp.ne.s32.totalorder %s71, %s74
      %p80 = scmp.eq.s32.totalorder %s19, 0
      %p81 = por %p79, %p80
      %p82 = scmp.ne.s32.totalorder %s71, %s74
      %p83 = scmp.eq.s32.totalorder %s24, 1
      %p84 = por %p82, %p83
      %p85 = scmp.ne.s32.totalorder %s74, %s75
      %p86 = scmp.eq.s32.totalorder %s24, 0
      %p87 = por %p85, %p86
      %p88 = scmp.ne.s32.totalorder %s74, %s75
      %p89 = scmp.eq.s32.totalorder %s25, 1
      %p90 = por %p88, %p89
      %p92 = scmp.ne.s32.totalorder %s75, %s91
      %p93 = scmp.eq.s32.totalorder %s25, 0
      %p94 = por %p92, %p93
      %s96 = sadd.s32 %s95, 1
      %p99 = scmp.eq.s32.totalorder %s19, 1
      %p100 = scmp.ne.s32.totalorder %s95, %s97
      %p101 = scmp.eq.s32.totalorder %s19, 0
      %p102 = por %p100, %p101
      %p103 = scmp.ne.s32.totalorder %s95, %s97
      %p104 = scmp.eq.s32.totalorder %s24, 1
      %p105 = por %p103, %p104
      %p106 = scmp.ne.s32.totalorder %s97, %s98
      %p107 = scmp.eq.s32.totalorder %s24, 0
      %p108 = por %p106, %p107
      %p109 = scmp.ne.s32.totalorder %s97, %s98
      %p110 = scmp.eq.s32.totalorder %s25, 1
      %p111 = por %p109, %p110
      %p113 = scmp.ne.s32.totalorder %s98, %s112
      %p114 = scmp.eq.s32.totalorder %s25, 0
      %p115 = por %p113, %p114
      %s117 = sadd.s32 %s116, 1
      %p120 = scmp.eq.s32.totalorder %s19, 1
      %p121 = scmp.ne.s32.totalorder %s116, %s118
      %p122 = scmp.eq.s32.totalorder %s19, 0
      %p123 = por %p121, %p122
      %p124 = scmp.ne.s32.totalorder %s116, %s118
      %p125 = scmp.eq.s32.totalorder %s24, 1
      %p126 = por %p124, %p125
      %p127 = scmp.ne.s32.totalorder %s118, %s119
      %p128 = scmp.eq.s32.totalorder %s24, 0
      %p129 = por %p127, %p128
      %p130 = scmp.ne.s32.totalorder %s118, %s119
      %p131 = scmp.eq.s32.totalorder %s25, 1
      %p132 = por %p130, %p131
      %p134 = scmp.ne.s32.totalorder %s119, %s133
      %p135 = scmp.eq.s32.totalorder %s25, 0
      %p136 = por %p134, %p135
      %s137 = ssub.s32 %s26, %s38
      %s138 = ssub.s32 %s27, %s34
      %s139 = sor.u32 %s137, %s138
      %p140 = scmp.eq.s32.totalorder %s139, 0
      %s142 = sadd.s32 %s141, 1
      %s143 = scalar_select %p140, %s141, %s142
      %p146 = pneg %p140
      %p147 = scmp.eq.s32.totalorder %s19, 1
      %p148 = por %p146, %p147
      %p149 = scmp.ne.s32.totalorder %s141, %s144
      %p150 = scmp.eq.s32.totalorder %s19, 0
      %p151 = por %p149, %p150
      %p152 = scmp.ne.s32.totalorder %s141, %s144
      %p153 = scmp.eq.s32.totalorder %s24, 1
      %p154 = por %p152, %p153
      %p155 = scmp.ne.s32.totalorder %s144, %s145
      %p156 = scmp.eq.s32.totalorder %s24, 0
      %p157 = por %p155, %p156
      %p158 = scmp.ne.s32.totalorder %s144, %s145
      %p159 = scmp.eq.s32.totalorder %s25, 1
      %p160 = por %p158, %p159
      %p162 = scmp.ne.s32.totalorder %s145, %s161
      %p163 = scmp.eq.s32.totalorder %s25, 0
      %p164 = por %p162, %p163
      %p165 = scmp.le.s32.totalorder 1, %s19
      %p166 = scmp.lt.s32.totalorder %s19, 3
      %p167 = pnand %p165, %p166
      %p168 = pneg %p167
      // Predicated region
      $region9: #{tpu_custom_call.1} parent=5 // pred_check
        _
      $region10: #{tpu_custom_call.1} parent=5 // pred_check_branch
        %170 = sbr.rel (%p167) target = $region12
      $region11: #{tpu_custom_call.1} parent=5 // pred_region
        %s171 = ssub.s32 %s19, 1
        // Predicated region
        $region13: #{tpu_custom_call.1} parent=11 // pred_check
          %p172 = pneg %p108
        $region14: #{tpu_custom_call.1} parent=11 // pred_check_branch
          %174 = sbr.rel (%p172) target = $region16
        $region15: #{tpu_custom_call.1} parent=11 // pred_region
          %s176 = ssub.s32 512, 512
          %177 = vsyncadd [#allocation6], %s176
          %s178 = sshll.u32 [#allocation7], 4
          %s179 = int_to_ptr.vmem [resolvable:$true] %s178
          %184 = dma.hbm_to_vmem [thread:$0]  %s2, 512, %s179, [#allocation6], 128, 128, 8
        $region16: #{tpu_custom_call.1} parent=11 // pred_fallthru
          _
        // Predicated region
        $region17: #{tpu_custom_call.1} parent=11 // pred_check
          %p185 = pneg %p129
        $region18: #{tpu_custom_call.1} parent=11 // pred_check_branch
          %187 = sbr.rel (%p185) target = $region20
        $region19: #{tpu_custom_call.1} parent=11 // pred_region
          _
        $region20: #{tpu_custom_call.1} parent=11 // pred_fallthru
          _
      $region12: #{tpu_custom_call.1} parent=5 // pred_fallthru
        _
      %p188 = scmp.lt.s32.totalorder %s19, 2
      // Predicated region
      $region21: #{tpu_custom_call.1} parent=5 // pred_check
        %p189 = pneg %p188
      $region22: #{tpu_custom_call.1} parent=5 // pred_check_branch
        %191 = sbr.rel (%p189) target = $region24
      $region23: #{tpu_custom_call.1} parent=5 // pred_region
        // Predicated region
        $region25: #{tpu_custom_call.1} parent=23 // pred_check
          %p192 = pneg %p53
        $region26: #{tpu_custom_call.1} parent=23 // pred_check_branch
          %194 = sbr.rel (%p192) target = $region28
        $region27: #{tpu_custom_call.1} parent=23 // pred_region
          %s195 = sand.u32 %s43, 1
          %s196 = scalar_lea.sflag [#allocation3], %s195
          %s197 = sand.u32 %s43, 1
          %s198 = smul.addr %s197, 16
          %s199 = scalar_lea.vmem [#allocation2], %s198
          %s200 = smul.u32 2, %s27
          %s202 = ssub.s32 256, 256
          %203 = vsyncadd %s196, %s202
          %s204 = smul.addr %s26, 2
          %s205 = sadd.s32 %s200, %s204
          %s206 = smul.addr %s205, 128
          %s207 = scalar_lea.hbm %s0, %s206
          %s209 = sshll.u32 %s199, 4
          %s210 = int_to_ptr.vmem [resolvable:$true] %s209
          %212 = dma.hbm_to_vmem [thread:$0]  %s207, 256, %s210, %s196
        $region28: #{tpu_custom_call.1} parent=23 // pred_fallthru
          _
        // Predicated region
        $region29: #{tpu_custom_call.1} parent=23 // pred_check
          %p213 = pneg %p81
        $region30: #{tpu_custom_call.1} parent=23 // pred_check_branch
          %215 = sbr.rel (%p213) target = $region32
        $region31: #{tpu_custom_call.1} parent=23 // pred_region
          %s216 = sand.u32 %s19, 1
          %s217 = scalar_lea.sflag [#allocation6], %s216
          %s218 = sand.u32 %s71, 1
          %s219 = smul.addr %s218, 16
          %s220 = scalar_lea.vmem [#allocation5], %s219
          %s221 = smul.u32 2, %s27
          %s223 = ssub.s32 256, 256
          %224 = vsyncadd %s217, %s223
          %s225 = smul.addr %s26, 2
          %s226 = sadd.s32 %s221, %s225
          %s227 = smul.addr %s226, 128
          %s228 = scalar_lea.hbm %s1, %s227
          %s230 = sshll.u32 %s220, 4
          %s231 = int_to_ptr.vmem [resolvable:$true] %s230
          %233 = dma.hbm_to_vmem [thread:$0]  %s228, 256, %s231, %s217
        $region32: #{tpu_custom_call.1} parent=23 // pred_fallthru
          _
      $region24: #{tpu_custom_call.1} parent=5 // pred_fallthru
        _
      %p234 = scmp.le.s32.totalorder 1, %s19
      %p235 = scmp.lt.s32.totalorder %s19, 3
      %p236 = pnand %p234, %p235
      %p237 = pneg %p236
      // Predicated region
      $region33: #{tpu_custom_call.1} parent=5 // pred_check
        _
      $region34: #{tpu_custom_call.1} parent=5 // pred_check_branch
        %239 = sbr.rel (%p236) target = $region36
      $region35: #{tpu_custom_call.1} parent=5 // pred_region
        %s240 = ssub.s32 %s19, 1
        %s241 = sand.u32 %s46, 1
        %s242 = scalar_lea.sflag [#allocation3], %s241
        %s243 = sand.u32 %s46, 1
        %s244 = smul.addr %s243, 16
        %s245 = scalar_lea.vmem [#allocation2], %s244
        // Predicated region
        $region37: #{tpu_custom_call.1} parent=35 // pred_check
          %p246 = pneg %p59
        $region38: #{tpu_custom_call.1} parent=35 // pred_check_branch
          %248 = sbr.rel (%p246) target = $region40
        $region39: #{tpu_custom_call.1} parent=35 // pred_region
          %249 = dma.done %s242, 256
        $region40: #{tpu_custom_call.1} parent=35 // pred_fallthru
          _
        %s250 = sand.u32 %s24, 1
        %s251 = scalar_lea.sflag [#allocation6], %s250
        %s252 = sand.u32 %s74, 1
        %s253 = smul.addr %s252, 16
        %s254 = scalar_lea.vmem [#allocation5], %s253
        // Predicated region
        $region41: #{tpu_custom_call.1} parent=35 // pred_check
          %p255 = pneg %p87
        $region42: #{tpu_custom_call.1} parent=35 // pred_check_branch
          %257 = sbr.rel (%p255) target = $region44
        $region43: #{tpu_custom_call.1} parent=35 // pred_region
          %258 = dma.done %s251, 256
        $region44: #{tpu_custom_call.1} parent=35 // pred_fallthru
          _
        // Predicated region
        $region45: #{tpu_custom_call.1} parent=35 // pred_check
          %p259 = pneg %p108
        $region46: #{tpu_custom_call.1} parent=35 // pred_check_branch
          %261 = sbr.rel (%p259) target = $region48
        $region47: #{tpu_custom_call.1} parent=35 // pred_region
          %262 = dma.done [#allocation6], 512
        $region48: #{tpu_custom_call.1} parent=35 // pred_fallthru
          _
        %s263 = sand.u32 %s46, 1
        %s264 = scalar_lea.sflag [#allocation3], %s263
        %s265 = sand.u32 %s46, 1
        %s266 = smul.addr %s265, 16
        %s267 = scalar_lea.vmem [#allocation2], %s266
        %p268 = pneg %p59
        %p269 = pneg %p56
        %s270 = sand.u32 %s24, 1
        %s271 = scalar_lea.sflag [#allocation6], %s270
        %s272 = sand.u32 %s74, 1
        %s273 = smul.addr %s272, 16
        %s274 = scalar_lea.vmem [#allocation5], %s273
        %p275 = pneg %p87
        %p276 = pneg %p84
        %p277 = pneg %p108
        %p278 = pneg %p105
        %p279 = pneg %p129
        %p280 = pneg %p126
        %p281 = pneg %p157
        %p282 = pneg %p154
        %s283 = sand.u32 %s144, 1
        %s284 = scalar_lea.sflag [#allocation4], %s283
        %s285 = sand.u32 %s144, 1
        %s286 = smul.addr %s285, 16
        %s287 = scalar_lea.vmem [#allocation8], %s286
        %s288 = smul.u32 2, %s29
        %s289 = smul.u32 2, %s29
        %s290 = smul.u32 2, %s29
        %v291 = vld [vmem:[%s245] sm:$0xff]
        %v292 = vld [vmem:[%s245 + $0x8] sm:$0xff]
        %v293 = vld [vmem:[%s254] sm:$0xff]
        %v294 = vld [vmem:[%s254 + $0x8] sm:$0xff]
        %v295 = vld [vmem:[#allocation7] sm:$0xff]
        %s296 = scalar_lea.vmem [#allocation7], 8
        %v297 = vld [vmem:[%s296] sm:$0xff]
        %vm298 = vcmask 64512
        %v300 = vsel %vm298, %v297, 0
        %302 = vmatprep.subr.mxu0 0.0
        %303 = vmatpush1.msra.mxu0 0.0
        %304 = vmatprep.subr.mxu0 0.0
        %305 = vmatpush1.msra.mxu0 0.0
        %306 = vmatprep.subr.mxu0 0.0
        %307 = vmatpush1.msra.mxu0 0.0
        %308 = vmatprep.subr.mxu0 0.0
        %309 = vmatpush1.msra.mxu0 0.0
        %310 = vmatprep.subr.mxu0 0.0
        %311 = vmatpush1.msra.mxu0 0.0
        %312 = vmatprep.subr.mxu0 0.0
        %313 = vmatpush1.msra.mxu0 0.0
        %314 = vmatprep.subr.mxu0 0.0
        %315 = vmatpush1.msra.mxu0 0.0
        %316 = vmatprep.subr.mxu0 0.0
        %317 = vmatpush1.msra.mxu0 0.0
        %318 = vmatprep.subr.mxu0 0.0
        %319 = vmatpush1.msra.mxu0 0.0
        %320 = vmatprep.subr.mxu0 0.0
        %321 = vmatpush1.msra.mxu0 0.0
        %322 = vmatprep.subr.mxu0 0.0
        %323 = vmatpush1.msra.mxu0 0.0
        %324 = vmatprep.subr.mxu0 0.0
        %325 = vmatpush1.msra.mxu0 0.0
        %326 = vmatprep.subr.mxu0 0.0
        %327 = vmatpush1.msra.mxu0 0.0
        %328 = vmatprep.subr.mxu0 0.0
        %329 = vmatpush1.msra.mxu0 0.0
        %330 = vmatprep.subr.mxu0 0.0
        %331 = vmatpush1.msra.mxu0 0.0
        %332 = vmatprep.subr.mxu0 %v294
        %333 = vmatpush1.msra.mxu0 %v293
        %334 = vmatprep.subr.mxu0 0.0
        %335 = vmatpush2.msra.mxu0 0.0
        %336 = vmatprep.subr.mxu0 0.0
        %337 = vmatpush2.msra.mxu0 0.0
        %338 = vmatprep.subr.mxu0 0.0
        %339 = vmatpush2.msra.mxu0 0.0
        %340 = vmatprep.subr.mxu0 0.0
        %341 = vmatpush2.msra.mxu0 0.0
        %342 = vmatprep.subr.mxu0 0.0
        %343 = vmatpush2.msra.mxu0 0.0
        %344 = vmatprep.subr.mxu0 0.0
        %345 = vmatpush2.msra.mxu0 0.0
        %346 = vmatprep.subr.mxu0 0.0
        %347 = vmatpush2.msra.mxu0 0.0
        %348 = vmatprep.subr.mxu0 0.0
        %349 = vmatpush2.msra.mxu0 0.0
        %350 = vmatprep.subr.mxu0 0.0
        %351 = vmatpush2.msra.mxu0 0.0
        %352 = vmatprep.subr.mxu0 0.0
        %353 = vmatpush2.msra.mxu0 0.0
        %354 = vmatprep.subr.mxu0 0.0
        %355 = vmatpush2.msra.mxu0 0.0
        %356 = vmatprep.subr.mxu0 0.0
        %357 = vmatpush2.msra.mxu0 0.0
        %358 = vmatprep.subr.mxu0 0.0
        %359 = vmatpush2.msra.mxu0 0.0
        %360 = vmatprep.subr.mxu0 0.0
        %361 = vmatpush2.msra.mxu0 0.0
        %362 = vmatprep.subr.mxu0 0.0
        %363 = vmatpush2.msra.mxu0 0.0
        %364 = vmatprep.subr.mxu0 0.0
        %365 = vmatpush2.msra.mxu0 0.0
        %366 = vmatprep.mubr.f32.mxu0 0.0
        %367 = vmatmul.mubr.f32.gmra.mxu0 %v300
        %v368 = vpop.f32.mrf.mxu0
        %v369 = vadd.f32 0.0, %v368
        %v370 = vpop.f32.mrf.mxu0
        %v371 = vadd.f32 0.0, %v370
        %372 = vdwg.mxu0
        %v374 = vsel %vm298, %v295, 0
        %376 = vmatprep.subr.mxu0 0.0
        %377 = vmatpush1.msra.mxu0 0.0
        %378 = vmatprep.subr.mxu0 0.0
        %379 = vmatpush1.msra.mxu0 0.0
        %380 = vmatprep.subr.mxu0 0.0
        %381 = vmatpush1.msra.mxu0 0.0
        %382 = vmatprep.subr.mxu0 0.0
        %383 = vmatpush1.msra.mxu0 0.0
        %384 = vmatprep.subr.mxu0 0.0
        %385 = vmatpush1.msra.mxu0 0.0
        %386 = vmatprep.subr.mxu0 0.0
        %387 = vmatpush1.msra.mxu0 0.0
        %388 = vmatprep.subr.mxu0 0.0
        %389 = vmatpush1.msra.mxu0 0.0
        %390 = vmatprep.subr.mxu0 0.0
        %391 = vmatpush1.msra.mxu0 0.0
        %392 = vmatprep.subr.mxu0 0.0
        %393 = vmatpush1.msra.mxu0 0.0
        %394 = vmatprep.subr.mxu0 0.0
        %395 = vmatpush1.msra.mxu0 0.0
        %396 = vmatprep.subr.mxu0 0.0
        %397 = vmatpush1.msra.mxu0 0.0
        %398 = vmatprep.subr.mxu0 0.0
        %399 = vmatpush1.msra.mxu0 0.0
        %400 = vmatprep.subr.mxu0 0.0
        %401 = vmatpush1.msra.mxu0 0.0
        %402 = vmatprep.subr.mxu0 0.0
        %403 = vmatpush1.msra.mxu0 0.0
        %404 = vmatprep.subr.mxu0 0.0
        %405 = vmatpush1.msra.mxu0 0.0
        %406 = vmatprep.subr.mxu0 %v292
        %407 = vmatpush1.msra.mxu0 %v291
        %408 = vmatprep.subr.mxu0 0.0
        %409 = vmatpush2.msra.mxu0 0.0
        %410 = vmatprep.subr.mxu0 0.0
        %411 = vmatpush2.msra.mxu0 0.0
        %412 = vmatprep.subr.mxu0 0.0
        %413 = vmatpush2.msra.mxu0 0.0
        %414 = vmatprep.subr.mxu0 0.0
        %415 = vmatpush2.msra.mxu0 0.0
        %416 = vmatprep.subr.mxu0 0.0
        %417 = vmatpush2.msra.mxu0 0.0
        %418 = vmatprep.subr.mxu0 0.0
        %419 = vmatpush2.msra.mxu0 0.0
        %420 = vmatprep.subr.mxu0 0.0
        %421 = vmatpush2.msra.mxu0 0.0
        %422 = vmatprep.subr.mxu0 0.0
        %423 = vmatpush2.msra.mxu0 0.0
        %424 = vmatprep.subr.mxu0 0.0
        %425 = vmatpush2.msra.mxu0 0.0
        %426 = vmatprep.subr.mxu0 0.0
        %427 = vmatpush2.msra.mxu0 0.0
        %428 = vmatprep.subr.mxu0 0.0
        %429 = vmatpush2.msra.mxu0 0.0
        %430 = vmatprep.subr.mxu0 0.0
        %431 = vmatpush2.msra.mxu0 0.0
        %432 = vmatprep.subr.mxu0 0.0
        %433 = vmatpush2.msra.mxu0 0.0
        %434 = vmatprep.subr.mxu0 0.0
        %435 = vmatpush2.msra.mxu0 0.0
        %436 = vmatprep.subr.mxu0 0.0
        %437 = vmatpush2.msra.mxu0 0.0
        %438 = vmatprep.subr.mxu0 0.0
        %439 = vmatpush2.msra.mxu0 0.0
        %440 = vmatprep.mubr.f32.mxu0 0.0
        %441 = vmatmul.mubr.f32.gmra.mxu0 %v374
        %v442 = vpop.f32.mrf.mxu0
        %v443 = vadd.f32 %v369, %v442
        %v444 = vpop.f32.mrf.mxu0
        %v445 = vadd.f32 %v371, %v444
        %446 = vdwg.mxu0
        %v447 = vld [vmem:[%s3] sm:$0xff]
        %449 = vset.pattern.permute.xlu0 0
        %450 = vperm.xlu0 %449, %v447
        %v451 = vpop.permute.xlu0 %450
        %v453 = vadd.f32 %v443, %v451
        %v454 = vadd.f32 %v445, %v451
        %v455 = vsub.f32 0.0, %v453
        %v456 = vsub.f32 0.0, %v454
        %v457 = vmul.f32 %v455, 1.442695
        %v458 = vpow.pop %v457
        %v459 = vmul.f32 %v456, 1.442695
        %v460 = vpow.pop %v459
        %v461 = vadd.f32 %v458, 1.0
        %v462 = vadd.f32 %v460, 1.0
        %v463 = vrcp.pop %v461
        %v464 = vmul.f32 1.0, %v463
        %v465 = vrcp.pop %v462
        %v466 = vmul.f32 1.0, %v465
        %v467 = vmul.f32 %v291, %v464
        %v468 = vmul.f32 %v292, %v466
        %v469 = vsub.f32 1.0, %v464
        %v470 = vsub.f32 1.0, %v466
        %v471 = vmul.f32 %v293, %v469
        %v472 = vmul.f32 %v294, %v470
        %s473 = scalar_lea.vmem [#allocation7], 16
        %v474 = vld [vmem:[%s473] sm:$0xff]
        %s475 = scalar_lea.vmem [#allocation7], 24
        %v476 = vld [vmem:[%s475] sm:$0xff]
        %v478 = vsel %vm298, %v476, 0
        %480 = vmatprep.subr.mxu0 0.0
        %481 = vmatpush1.msra.mxu0 0.0
        %482 = vmatprep.subr.mxu0 0.0
        %483 = vmatpush1.msra.mxu0 0.0
        %484 = vmatprep.subr.mxu0 0.0
        %485 = vmatpush1.msra.mxu0 0.0
        %486 = vmatprep.subr.mxu0 0.0
        %487 = vmatpush1.msra.mxu0 0.0
        %488 = vmatprep.subr.mxu0 0.0
        %489 = vmatpush1.msra.mxu0 0.0
        %490 = vmatprep.subr.mxu0 0.0
        %491 = vmatpush1.msra.mxu0 0.0
        %492 = vmatprep.subr.mxu0 0.0
        %493 = vmatpush1.msra.mxu0 0.0
        %494 = vmatprep.subr.mxu0 0.0
        %495 = vmatpush1.msra.mxu0 0.0
        %496 = vmatprep.subr.mxu0 0.0
        %497 = vmatpush1.msra.mxu0 0.0
        %498 = vmatprep.subr.mxu0 0.0
        %499 = vmatpush1.msra.mxu0 0.0
        %500 = vmatprep.subr.mxu0 0.0
        %501 = vmatpush1.msra.mxu0 0.0
        %502 = vmatprep.subr.mxu0 0.0
        %503 = vmatpush1.msra.mxu0 0.0
        %504 = vmatprep.subr.mxu0 0.0
        %505 = vmatpush1.msra.mxu0 0.0
        %506 = vmatprep.subr.mxu0 0.0
        %507 = vmatpush1.msra.mxu0 0.0
        %508 = vmatprep.subr.mxu0 0.0
        %509 = vmatpush1.msra.mxu0 0.0
        %510 = vmatprep.subr.mxu0 %v468
        %511 = vmatpush1.msra.mxu0 %v467
        %512 = vmatprep.subr.mxu0 0.0
        %513 = vmatpush2.msra.mxu0 0.0
        %514 = vmatprep.subr.mxu0 0.0
        %515 = vmatpush2.msra.mxu0 0.0
        %516 = vmatprep.subr.mxu0 0.0
        %517 = vmatpush2.msra.mxu0 0.0
        %518 = vmatprep.subr.mxu0 0.0
        %519 = vmatpush2.msra.mxu0 0.0
        %520 = vmatprep.subr.mxu0 0.0
        %521 = vmatpush2.msra.mxu0 0.0
        %522 = vmatprep.subr.mxu0 0.0
        %523 = vmatpush2.msra.mxu0 0.0
        %524 = vmatprep.subr.mxu0 0.0
        %525 = vmatpush2.msra.mxu0 0.0
        %526 = vmatprep.subr.mxu0 0.0
        %527 = vmatpush2.msra.mxu0 0.0
        %528 = vmatprep.subr.mxu0 0.0
        %529 = vmatpush2.msra.mxu0 0.0
        %530 = vmatprep.subr.mxu0 0.0
        %531 = vmatpush2.msra.mxu0 0.0
        %532 = vmatprep.subr.mxu0 0.0
        %533 = vmatpush2.msra.mxu0 0.0
        %534 = vmatprep.subr.mxu0 0.0
        %535 = vmatpush2.msra.mxu0 0.0
        %536 = vmatprep.subr.mxu0 0.0
        %537 = vmatpush2.msra.mxu0 0.0
        %538 = vmatprep.subr.mxu0 0.0
        %539 = vmatpush2.msra.mxu0 0.0
        %540 = vmatprep.subr.mxu0 0.0
        %541 = vmatpush2.msra.mxu0 0.0
        %542 = vmatprep.subr.mxu0 0.0
        %543 = vmatpush2.msra.mxu0 0.0
        %544 = vmatprep.mubr.f32.mxu0 0.0
        %545 = vmatmul.mubr.f32.gmra.mxu0 %v478
        %v546 = vpop.f32.mrf.mxu0
        %v547 = vadd.f32 0.0, %v546
        %v548 = vpop.f32.mrf.mxu0
        %v549 = vadd.f32 0.0, %v548
        %550 = vdwg.mxu0
        %v552 = vsel %vm298, %v474, 0
        %554 = vmatprep.subr.mxu0 0.0
        %555 = vmatpush1.msra.mxu0 0.0
        %556 = vmatprep.subr.mxu0 0.0
        %557 = vmatpush1.msra.mxu0 0.0
        %558 = vmatprep.subr.mxu0 0.0
        %559 = vmatpush1.msra.mxu0 0.0
        %560 = vmatprep.subr.mxu0 0.0
        %561 = vmatpush1.msra.mxu0 0.0
        %562 = vmatprep.subr.mxu0 0.0
        %563 = vmatpush1.msra.mxu0 0.0
        %564 = vmatprep.subr.mxu0 0.0
        %565 = vmatpush1.msra.mxu0 0.0
        %566 = vmatprep.subr.mxu0 0.0
        %567 = vmatpush1.msra.mxu0 0.0
        %568 = vmatprep.subr.mxu0 0.0
        %569 = vmatpush1.msra.mxu0 0.0
        %570 = vmatprep.subr.mxu0 0.0
        %571 = vmatpush1.msra.mxu0 0.0
        %572 = vmatprep.subr.mxu0 0.0
        %573 = vmatpush1.msra.mxu0 0.0
        %574 = vmatprep.subr.mxu0 0.0
        %575 = vmatpush1.msra.mxu0 0.0
        %576 = vmatprep.subr.mxu0 0.0
        %577 = vmatpush1.msra.mxu0 0.0
        %578 = vmatprep.subr.mxu0 0.0
        %579 = vmatpush1.msra.mxu0 0.0
        %580 = vmatprep.subr.mxu0 0.0
        %581 = vmatpush1.msra.mxu0 0.0
        %582 = vmatprep.subr.mxu0 0.0
        %583 = vmatpush1.msra.mxu0 0.0
        %584 = vmatprep.subr.mxu0 %v472
        %585 = vmatpush1.msra.mxu0 %v471
        %586 = vmatprep.subr.mxu0 0.0
        %587 = vmatpush2.msra.mxu0 0.0
        %588 = vmatprep.subr.mxu0 0.0
        %589 = vmatpush2.msra.mxu0 0.0
        %590 = vmatprep.subr.mxu0 0.0
        %591 = vmatpush2.msra.mxu0 0.0
        %592 = vmatprep.subr.mxu0 0.0
        %593 = vmatpush2.msra.mxu0 0.0
        %594 = vmatprep.subr.mxu0 0.0
        %595 = vmatpush2.msra.mxu0 0.0
        %596 = vmatprep.subr.mxu0 0.0
        %597 = vmatpush2.msra.mxu0 0.0
        %598 = vmatprep.subr.mxu0 0.0
        %599 = vmatpush2.msra.mxu0 0.0
        %600 = vmatprep.subr.mxu0 0.0
        %601 = vmatpush2.msra.mxu0 0.0
        %602 = vmatprep.subr.mxu0 0.0
        %603 = vmatpush2.msra.mxu0 0.0
        %604 = vmatprep.subr.mxu0 0.0
        %605 = vmatpush2.msra.mxu0 0.0
        %606 = vmatprep.subr.mxu0 0.0
        %607 = vmatpush2.msra.mxu0 0.0
        %608 = vmatprep.subr.mxu0 0.0
        %609 = vmatpush2.msra.mxu0 0.0
        %610 = vmatprep.subr.mxu0 0.0
        %611 = vmatpush2.msra.mxu0 0.0
        %612 = vmatprep.subr.mxu0 0.0
        %613 = vmatpush2.msra.mxu0 0.0
        %614 = vmatprep.subr.mxu0 0.0
        %615 = vmatpush2.msra.mxu0 0.0
        %616 = vmatprep.subr.mxu0 0.0
        %617 = vmatpush2.msra.mxu0 0.0
        %618 = vmatprep.mubr.f32.mxu0 0.0
        %619 = vmatmul.mubr.f32.gmra.mxu0 %v552
        %v620 = vpop.f32.mrf.mxu0
        %v621 = vadd.f32 %v547, %v620
        %v622 = vpop.f32.mrf.mxu0
        %v623 = vadd.f32 %v549, %v622
        %624 = vdwg.mxu0
        %s625 = scalar_lea.vmem %s3, 8
        %v626 = vld [vmem:[%s625] sm:$0xff]
        %628 = vset.pattern.permute.xlu0 0
        %629 = vperm.xlu0 %628, %v626
        %v630 = vpop.permute.xlu0 %629
        %v632 = vadd.f32 %v621, %v630
        %v633 = vadd.f32 %v623, %v630
        %634 = vst [vmem:[%s287] sm:$0xff] %v632
        %635 = vst [vmem:[%s287 + $0x8] sm:$0xff] %v633
        %s636 = sand.u32 %s144, 1
        %s637 = scalar_lea.sflag [#allocation4], %s636
        %s638 = sand.u32 %s144, 1
        %s639 = smul.addr %s638, 16
        %s640 = scalar_lea.vmem [#allocation8], %s639
        // Predicated region
        $region49: #{tpu_custom_call.1} parent=35 // pred_check
          %p641 = pneg %p154
        $region50: #{tpu_custom_call.1} parent=35 // pred_check_branch
          %643 = sbr.rel (%p641) target = $region52
        $region51: #{tpu_custom_call.1} parent=35 // pred_region
          %s644 = smul.u32 2, %s29
          %s646 = ssub.s32 256, 256
          %647 = vsyncadd %s637, %s646
          %s648 = smul.addr %s28, 2
          %s649 = sadd.s32 %s644, %s648
          %s650 = smul.addr %s649, 128
          %s651 = scalar_lea.hbm %s4, %s650
          %s653 = sshll.u32 %s640, 4
          %s654 = int_to_ptr.vmem [resolvable:$true] %s653
          %656 = dma.vmem_to_hbm [thread:$0]  %s654, 256, %s651, %s637
        $region52: #{tpu_custom_call.1} parent=35 // pred_fallthru
          _
      $region36: #{tpu_custom_call.1} parent=5 // pred_fallthru
        _
      %p657 = scmp.le.s32.totalorder 2, %s19
      // Predicated region
      $region53: #{tpu_custom_call.1} parent=5 // pred_check
        %p658 = pneg %p657
      $region54: #{tpu_custom_call.1} parent=5 // pred_check_branch
        %660 = sbr.rel (%p658) target = $region56
      $region55: #{tpu_custom_call.1} parent=5 // pred_region
        %s661 = ssub.s32 %s19, 2
        // Predicated region
        $region57: #{tpu_custom_call.1} parent=55 // pred_check
          %p662 = pneg %p160
        $region58: #{tpu_custom_call.1} parent=55 // pred_check_branch
          %664 = sbr.rel (%p662) target = $region60
        $region59: #{tpu_custom_call.1} parent=55 // pred_region
          %s665 = sand.u32 %s145, 1
          %s666 = scalar_lea.sflag [#allocation4], %s665
          %s667 = sand.u32 %s145, 1
          %s668 = smul.addr %s667, 16
          %s669 = scalar_lea.vmem [#allocation8], %s668
          %670 = dma.done %s666, 256
        $region60: #{tpu_custom_call.1} parent=55 // pred_fallthru
          _
      $region56: #{tpu_custom_call.1} parent=5 // pred_fallthru
        _
    $region6: #{tpu_custom_call.1} parent=1 // loop_footer
      %s23 = sadd.s32 1, %s19
    $region7: #{tpu_custom_call.1} parent=1 // loop_footer_branch
      %18 = sbr.rel target = $region3
    $region8: #{tpu_custom_call.1} parent=1 // loop_exit
      _
    %671 = vsyncpa [#allocation3], 1
    %s672 = scalar_lea.sflag [#allocation3], 1
    %673 = vsyncpa %s672, 1
    %674 = vsyncpa [#allocation6], 1
    %s675 = scalar_lea.sflag [#allocation6], 1
    %676 = vsyncpa %s675, 1
    %677 = vsyncpa [#allocation4], 1
    %s678 = scalar_lea.sflag [#allocation4], 1
    %679 = vsyncpa %s678, 1

</llo_original>
